<compile_context>
chip_gen: v7x
topology: tpu7x:2x2x1
jax: 0.10.0
libtpu: 0.0.40
codegen_flags: <defaults>
</compile_context>

<pallas_src>
import functools
import math

import jax
import jax.numpy as jnp
from jax import lax
from jax.experimental import pallas as pl
from jax.experimental.pallas import tpu as pltpu


# ---------------------------------------------------------------------------
# Reference sinusoidal table (same as the torch buffer) — used for checking.
# ---------------------------------------------------------------------------
def make_pe_table(dim: int, max_len: int = 5000) -> jnp.ndarray:
    if dim % 2 != 0:
        raise ValueError(f"Cannot use sin/cos positional encoding with odd dim (got dim={dim})")
    position = jnp.arange(0, max_len, dtype=jnp.float32)[:, None]          # (L, 1)
    div_term = jnp.exp(
        jnp.arange(0, dim, 2, dtype=jnp.float32) * (-(math.log(10000.0) / dim))
    )                                                                       # (dim/2,)
    ang = position * div_term                                               # (L, dim/2)
    pe = jnp.stack([jnp.sin(ang), jnp.cos(ang)], axis=-1).reshape(max_len, dim)
    return pe[:, None, :]                                                   # (L, 1, dim)


# ---------------------------------------------------------------------------
# Kernel
# ---------------------------------------------------------------------------
def _pe_kernel(meta_ref, aux_ref, emb_ref, out_ref, *, block_s, scale):
    # meta_ref: SMEM int32[2] = [pos_base, pos_stride]
    # aux_ref : VMEM f32[2, tc]  row 0 = inverse frequency, row 1 = cos-selector
    # emb_ref : VMEM (bs, tc)    lane-dense flattened embedding tile
    i = pl.program_id(0)

    # absolute sequence position for every row of this block: base + stride*row
    row = lax.broadcasted_iota(jnp.int32, (block_s, 1), 0)
    pos = meta_ref[0] + meta_ref[1] * (i * block_s + row)        # (bs, 1) int32
    pos_f = pos.astype(jnp.float32)

    aux = aux_ref[...]                                           # (2, tc)
    inv_freq = aux[0:1, :]                                       # (1, tc)
    is_cos = aux[1:2, :] > 0.5                                   # (1, tc)

    ang = pos_f * inv_freq                                       # (bs, tc) VPU
    pe = jnp.where(is_cos, jnp.cos(ang), jnp.sin(ang))           # EUP + select

    out_ref[...] = (emb_ref[...].astype(jnp.float32) * scale + pe).astype(out_ref.dtype)


# ---------------------------------------------------------------------------
# Wrapper helpers
# ---------------------------------------------------------------------------
def _round_up(x, m):
    return ((x + m - 1) // m) * m


def _round_down(x, m):
    return (x // m) * m


def _vmem_capacity_bytes() -> int:
    try:
        return int(pltpu.get_tpu_info().vmem_capacity_bytes)
    except Exception:
        return 64 * 1024 * 1024          # conservative (v7x-sized) fallback


def _choose_tiles(S, C, itemsize, vmem_cap):
    """Pick (block_s, block_c) from a per-generation VMEM byte budget."""
    # Live VMEM ~ 2x(emb tile) + 2x(out tile) + tiny aux with default double
    # buffering -> budget each tile at vmem_cap/32 (~2 MiB v7x, ~4 MiB v5e/v6e).
    tile_budget = max(512 * 1024, vmem_cap // 32)

    # Lane axis: keep full rows unless even an 8-row tile would blow the
    # budget; only split on 128-lane boundaries (block-shape rule).
    if C % 128 == 0 and C > 128:
        tc_cap = max(128, _round_down(tile_budget // (8 * itemsize), 128))
        tc = min(C, tc_cap)
    else:
        tc = C                                   # full extent is always legal

    # Sublane axis: multiple of 8 (or the full extent), sized to the budget.
    if S <= 8 or S * tc * itemsize <= tile_budget:
        bs = S
    else:
        bs_cap = max(8, _round_down(tile_budget // (tc * itemsize), 8))
        bs = max(8, min(bs_cap, _round_down(S, 8)))

    # Give both v7x TensorCores work when the grid would be a single step
    # (neutral on single-core v5e/v6e; per-step overhead ~0.35 us).
    n_s = (S + bs - 1) // bs
    n_c = (C + tc - 1) // tc
    if n_s * n_c < 2:
        if S >= 16:
            bs = _round_up((S + 1) // 2, 8)
        elif C >= 256 and C % 256 == 0:
            tc = C // 2
    return bs, tc


def _make_pe_aux(dim: int, batch: int) -> jnp.ndarray:
    """(2, batch*dim) f32: row 0 = inverse frequency per flattened column,
    row 1 = 1.0 where the column is a cos (odd d) feature, 0.0 for sin."""
    half = jnp.arange(dim // 2, dtype=jnp.float32)
    div_term = jnp.exp(half * (-2.0 * math.log(10000.0) / dim))      # (dim/2,)
    inv_freq = jnp.repeat(div_term, 2)                               # (dim,)
    parity = jnp.tile(jnp.array([0.0, 1.0], jnp.float32), dim // 2)  # (dim,)
    aux = jnp.stack([inv_freq, parity], axis=0)                      # (2, dim)
    return jnp.tile(aux, (1, batch))                                 # (2, batch*dim)


# ---------------------------------------------------------------------------
# Public entry point
# ---------------------------------------------------------------------------
def positional_encoding(emb: jnp.ndarray, step=None, *, donate_emb: bool = False) -> jnp.ndarray:
    """emb: (S, B, D). Returns emb * sqrt(D) + pe[:S] (or + pe[step])."""
    S, B, D = emb.shape
    if D % 2 != 0:
        raise ValueError(f"Cannot use sin/cos positional encoding with odd dim (got dim={D})")
    C = B * D
    scale = float(math.sqrt(D))
    itemsize = jnp.dtype(emb.dtype).itemsize

    emb2d = emb.reshape(S, C)                 # lane-dense 2-D view
    aux = _make_pe_aux(D, B)

    # [pos_base, pos_stride]: pos = base + stride * row_index
    if step is None:
        meta = jnp.array([0, 1], dtype=jnp.int32)
    else:
        meta = jnp.asarray([step, 0], dtype=jnp.int32)   # torch: pe[step] for all rows

    vmem_cap = _vmem_capacity_bytes()
    bs, tc = _choose_tiles(S, C, itemsize, vmem_cap)
    grid = (pl.cdiv(S, bs), pl.cdiv(C, tc))

    tile_bytes = bs * tc * itemsize
    vmem_limit = int(min(max(4 * tile_bytes + (2 << 20), 16 << 20), vmem_cap * 3 // 4))

    kernel = functools.partial(_pe_kernel, block_s=bs, scale=scale)

    out2d = pl.pallas_call(
        kernel,
        out_shape=jax.ShapeDtypeStruct((S, C), emb.dtype),
        grid_spec=pltpu.PrefetchScalarGridSpec(
            num_scalar_prefetch=1,                                   # meta -> SMEM
            grid=grid,
            in_specs=[
                pl.BlockSpec((2, tc), lambda i, j, meta: (0, j)),    # aux (tiny, lane-tiled)
                pl.BlockSpec((bs, tc), lambda i, j, meta: (i, j)),   # emb tile
            ],
            out_specs=pl.BlockSpec((bs, tc), lambda i, j, meta: (i, j)),
        ),
        compiler_params=pltpu.CompilerParams(
            dimension_semantics=("parallel", "parallel"),
            vmem_limit_bytes=vmem_limit,
        ),
        # Inputs are (meta, aux, emb2d) -> emb2d is input index 2.
        input_output_aliases=({2: 0} if donate_emb else {}),
    )(meta, aux, emb2d)

    # TODO(synk): nn.Dropout is identity in eval mode; training-mode dropout is
    # not reproducible vs. torch RNG and is therefore omitted.
    return out2d.reshape(S, B, D)


# ---------------------------------------------------------------------------
# Self-test
# ---------------------------------------------------------------------------
if __name__ == "__main__":
    dim, batch, seq_len, max_len = 32, 2, 8, 64

    key = jax.random.PRNGKey(0)
    k0, k1, k2 = jax.random.split(key, 3)

    pe_table = make_pe_table(dim, max_len)                 # (max_len, 1, dim)

    # --- path 1: step=None, small shapes --------------------------------
    emb = jax.random.normal(k0, (seq_len, batch, dim), dtype=jnp.float32)
    out = jax.block_until_ready(positional_encoding(emb))
    ref = emb * math.sqrt(dim) + pe_table[:seq_len]
    assert out.shape == emb.shape
    assert jnp.allclose(out, ref, atol=1e-4, rtol=1e-4), "mismatch (step=None)"

    # --- path 2: ragged S -> multi-step grid with a partial last block ---
    emb2 = jax.random.normal(k1, (20, 4, dim), dtype=jnp.float32)
    out2 = jax.block_until_ready(positional_encoding(emb2))
    ref2 = emb2 * math.sqrt(dim) + pe_table[:20]
    assert jnp.allclose(out2, ref2, atol=1e-4, rtol=1e-4), "mismatch (ragged S)"

    # --- path 3: stepwise decode (seq_len = 1, step = 3) ------------------
    emb1 = jax.random.normal(k2, (1, batch, dim), dtype=jnp.float32)
    out1 = jax.block_until_ready(positional_encoding(emb1, step=3))
    ref1 = emb1 * math.sqrt(dim) + pe_table[3]
    assert jnp.allclose(out1, ref1, atol=1e-4, rtol=1e-4), "mismatch (step)"

    print("KERNEL_OK")
</pallas_src>

<mosaic_0001>
module attributes {stable_mosaic.version = 11 : i64} {
  func.func @_pe_kernel(%arg0: i32, %arg1: i32, %arg2: memref<2xi32, #tpu.memory_space<smem>>, %arg3: memref<2x64xf32, #tpu.memory_space<vmem>>, %arg4: memref<8x64xf32, #tpu.memory_space<vmem>>, %arg5: memref<8x64xf32, #tpu.memory_space<vmem>>) attributes {dimension_semantics = [#tpu.dimension_semantics<parallel>, #tpu.dimension_semantics<parallel>], iteration_bounds = array<i64: 1, 1>, scalar_prefetch = 1 : i64, scratch_operands = 0 : i64, tpu.core_type = #tpu.core_type<tc>, window_params = [{transform_indices = @transform_0, window_bounds = array<i64: 2, 64>}, {transform_indices = @transform_1, window_bounds = array<i64: 8, 64>}, {transform_indices = @transform_2, window_bounds = array<i64: 8, 64>}]} {
    %0 = tpu.iota {dimensions = array<i32: 0>} : vector<8x1xi32>
    %c0 = arith.constant 0 : index
    %1 = memref.load %arg2[%c0] : memref<2xi32, #tpu.memory_space<smem>>
    %c1 = arith.constant 1 : index
    %2 = memref.load %arg2[%c1] : memref<2xi32, #tpu.memory_space<smem>>
    %c8_i32 = arith.constant 8 : i32
    %3 = arith.muli %arg0, %c8_i32 : i32
    %4 = vector.broadcast %3 : i32 to vector<8x1xi32>
    %5 = arith.addi %4, %0 : vector<8x1xi32>
    %6 = vector.broadcast %2 : i32 to vector<8x1xi32>
    %7 = arith.muli %6, %5 : vector<8x1xi32>
    %8 = vector.broadcast %1 : i32 to vector<8x1xi32>
    %9 = arith.addi %8, %7 : vector<8x1xi32>
    %10 = arith.sitofp %9 : vector<8x1xi32> to vector<8x1xf32>
    %c0_0 = arith.constant 0 : index
    %c0_1 = arith.constant 0 : index
    %11 = vector.load %arg3[%c0_0, %c0_1] : memref<2x64xf32, #tpu.memory_space<vmem>>, vector<2x64xf32>
    %12 = vector.extract_strided_slice %11 {offsets = [0, 0], sizes = [1, 64], strides = [1, 1]} : vector<2x64xf32> to vector<1x64xf32>
    %13 = vector.extract_strided_slice %11 {offsets = [1, 0], sizes = [1, 64], strides = [1, 1]} : vector<2x64xf32> to vector<1x64xf32>
    %cst = arith.constant 5.000000e-01 : f32
    %14 = vector.broadcast %cst : f32 to vector<1x64xf32>
    %15 = arith.cmpf ogt, %13, %14 : vector<1x64xf32>
    %16 = vector.broadcast %10 : vector<8x1xf32> to vector<8x64xf32>
    %17 = vector.broadcast %12 : vector<1x64xf32> to vector<8x64xf32>
    %18 = arith.mulf %16, %17 : vector<8x64xf32>
    %19 = math.cos %18 : vector<8x64xf32>
    %20 = math.sin %18 : vector<8x64xf32>
    %21 = vector.shape_cast %15 : vector<1x64xi1> to vector<1x64xi1>
    %22 = vector.broadcast %21 : vector<1x64xi1> to vector<8x64xi1>
    %23 = arith.select %22, %19, %20 : vector<8x64xi1>, vector<8x64xf32>
    %c0_2 = arith.constant 0 : index
    %c0_3 = arith.constant 0 : index
    %24 = vector.load %arg4[%c0_2, %c0_3] : memref<8x64xf32, #tpu.memory_space<vmem>>, vector<8x64xf32>
    %cst_4 = arith.constant 5.65685415 : f32
    %25 = vector.broadcast %cst_4 : f32 to vector<8x64xf32>
    %26 = arith.mulf %24, %25 : vector<8x64xf32>
    %27 = arith.addf %26, %23 : vector<8x64xf32>
    %c0_5 = arith.constant 0 : index
    %c0_6 = arith.constant 0 : index
    %28 = vector.load %arg5[%c0_5, %c0_6] : memref<8x64xf32, #tpu.memory_space<vmem>>, vector<8x64xf32>
    tpu.vector_store %arg5[%c0_5, %c0_6], %27 {strides = array<i32>} : memref<8x64xf32, #tpu.memory_space<vmem>>, vector<8x64xf32>,
    return
  }
  func.func @transform_0(%arg0: i32, %arg1: i32, %arg2: memref<2xi32, #tpu.memory_space<smem>>) -> (i32, i32) {
    %c0_i32 = arith.constant 0 : i32
    %c0_i32_0 = arith.constant 0 : i32
    return %c0_i32, %arg1 : i32, i32
  }
  func.func @transform_1(%arg0: i32, %arg1: i32, %arg2: memref<2xi32, #tpu.memory_space<smem>>) -> (i32, i32) {
    %c0_i32 = arith.constant 0 : i32
    return %arg0, %arg1 : i32, i32
  }
  func.func @transform_2(%arg0: i32, %arg1: i32, %arg2: memref<2xi32, #tpu.memory_space<smem>>) -> (i32, i32) {
    %c0_i32 = arith.constant 0 : i32
    return %arg0, %arg1 : i32, i32
  }
}

</mosaic_0001>

<llo_original>
// kernel: tpu_custom_call.1
$region0: #{tpu_custom_call.1}
  #allocation0 [shape = 'u32[]', space=smem, size = 0x4, offset = 0x4, fixed_abs, tag = 'smem constant byte address 0x4 - core index']
  #allocation1 [shape = 'u32[144,128]{1,0:T(1,128)}', space=vmem, size = 0x12000, scoped, tag = 'internal scratch']
  #allocation2 [shape = 's32[1]{0}', space=sflag, size = 0x4, scoped, tag = 'scoped memory for tpu_custom_call.1']
  #allocation3 [shape = 'u8[512]{0}', space=smem, size = 0x200, scoped, tag = 'prefetched SMEM operand 0']
  %s0 = inlined_call_operand.hbm [shape: s32[2], index: 0, kind: input, shape index: {}]
  %s1 = inlined_call_operand.vmem [shape: f32[2,64], index: 1, kind: input, shape index: {}]
  %s2 = inlined_call_operand.hbm [shape: f32[8,64], index: 2, kind: input, shape index: {}]
  %s3 = inlined_call_operand.hbm [shape: f32[8,64], index: 3, kind: output, shape index: {}]
  %s4 = sld [smem:[#allocation0]]
  $region22: #{tpu_custom_call.1} parent=0
    _
  %s6 = ssub.s32 1, %s4
  %s7 = scalar_select 0, %s6, %s4
  %9 = dma.hbm_to_smem %s0, 16, [#allocation3], [#allocation2]
  %10 = dma.done [#allocation2], 16
  %11 = sfence
  $region1: #{tpu_custom_call.1} parent=0
    #allocation4 [shape = 'u8[4096]{0}', space=vmem, size = 0x1000, scoped, tag = 'input window, operand 2, single buffered']
    #allocation5 [shape = 's32[1]{0}', space=sflag, size = 0x4, scoped, tag = 'scoped memory for tpu_custom_call.1']
    #allocation6 [shape = 's32[1]{0}', space=sflag, size = 0x4, scoped, tag = 'scoped memory for tpu_custom_call.1']
    #allocation7 [shape = 'u8[4096]{0}', space=vmem, size = 0x1000, scoped, tag = 'output window, operand 0, single buffered']
    %12 = vsyncpa [#allocation5], 0
    %13 = vsyncpa [#allocation6], 0
    // Predicated region
    $region2: #{tpu_custom_call.1} parent=1 // pred_check
      _
    $region3: #{tpu_custom_call.1} parent=1 // pred_check_branch
      %15 = sbr.rel (0) target = $region5
    $region4: #{tpu_custom_call.1} parent=1 // pred_region
      _
    $region5: #{tpu_custom_call.1} parent=1 // pred_fallthru
      _
    // Predicated region
    $region6: #{tpu_custom_call.1} parent=1 // pred_check
      _
    $region7: #{tpu_custom_call.1} parent=1 // pred_check_branch
      %17 = sbr.rel (0) target = $region9
    $region8: #{tpu_custom_call.1} parent=1 // pred_region
      %s19 = ssub.s32 128, 128
      %20 = vsyncadd [#allocation5], %s19
      %s22 = sshll.u32 [#allocation4], 4
      %s23 = int_to_ptr.vmem [resolvable:$true] %s22
      %25 = dma.hbm_to_vmem [thread:$0]  %s2, 128, %s23, [#allocation5]
    $region9: #{tpu_custom_call.1} parent=1 // pred_fallthru
      _
    // Predicated region
    $region10: #{tpu_custom_call.1} parent=1 // pred_check
      _
    $region11: #{tpu_custom_call.1} parent=1 // pred_check_branch
      %27 = sbr.rel (0) target = $region13
    $region12: #{tpu_custom_call.1} parent=1 // pred_region
      %28 = dma.done [#allocation5], 128
    $region13: #{tpu_custom_call.1} parent=1 // pred_fallthru
      _
    %v29 = vlaneseq
    %v30 = vshrl.u32 %v29, 7
    %s31 = sld [smem:[#allocation3]]
    %s32 = sld [smem:[#allocation3 + $0x1]]
    %s33 = smul.u32 0, 8
    %v34 = vstv %s33
    %v35 = vadd.s32 %v34, %v30
    %v36 = vstv %s32
    %v37 = vmul.u32 %v36, %v35
    %v38 = vstv %s31
    %v39 = vadd.s32 %v38, %v37
    %v40 = vcvt.s32.f32 %v39
    %v41 = vld [vmem:[%s1] sm:$0x3]
    %vm42 = vcmp.gt.f32.partialorder %v41, 0.5
    %v43 = vlaneseq
    %v44 = vshrl.u32 %v43, 7
    %v45 = vsub.s32 0, %v44
    %v46 = vrot.slane %v41, %v45
    %v47 = vmul.f32 %v40, %v46
    %v48 = vand.u32 2147483647, %v47
    %vm49 = vcmp.le.f32.partialorder %v48, 0.7853982
    %vm50 = vcmp.lt.s32.totalorder %v47, 0
    %v51 = vand.u32 %v47, 2139095040
    %v52 = vshrl.u32 %v51, 23
    %v53 = vsub.s32 %v52, 127
    %v54 = vand.u32 2147483647, %v47
    %v55 = vand.u32 %v54, 8388607
    %v56 = vor.u32 %v55, 8388608
    %v57 = vsub.s32 0, %v56
    %v58 = vadd.s32 %v53, 1
    %vm59 = vcmp.gt.s32.totalorder %v58, 0
    %v60 = vsel %vm59, %v58, 0
    %v61 = vshrl.u32 %v60, 5
    %v62 = vand.u32 %v60, 31
    %v63 = vsub.s32 32, %v62
    %v64 = vshrl.u32 683565275, %v63
    %v65 = vshll.u32 683565275, %v62
    %v66 = vshrl.u32 2475754826, %v63
    %v67 = vor.u32 %v65, %v66
    %v68 = vshll.u32 2475754826, %v62
    %v69 = vshrl.u32 2131351028, %v63
    %v70 = vor.u32 %v68, %v69
    %v71 = vshll.u32 2131351028, %v62
    %v72 = vshrl.u32 2102212464, %v63
    %v73 = vor.u32 %v71, %v72
    %v74 = vshll.u32 2102212464, %v62
    %v75 = vshrl.u32 920167782, %v63
    %v76 = vor.u32 %v74, %v75
    %v77 = vshll.u32 920167782, %v62
    %v78 = vshrl.u32 1326507024, %v63
    %v79 = vor.u32 %v77, %v78
    %vm80 = vcmp.lt.s32.totalorder %v61, 1
    %vm81 = vcmp.lt.s32.totalorder %v61, 2
    %vm82 = vcmp.lt.s32.totalorder %v61, 3
    %vm83 = vcmp.lt.s32.totalorder %v61, 4
    %v84 = vsel %vm80, %v64, %v67
    %v85 = vsel %vm83, %v73, 2102212464
    %v86 = vsel %vm82, %v70, %v85
    %v87 = vsel %vm81, %v84, %v86
    %v88 = vsel %vm80, %v67, %v70
    %v89 = vsel %vm83, %v76, 920167782
    %v90 = vsel %vm82, %v73, %v89
    %v91 = vsel %vm81, %v88, %v90
    %v92 = vsel %vm80, %v70, %v73
    %v93 = vsel %vm83, %v79, 1326507024
    %v94 = vsel %vm82, %v76, %v93
    %v95 = vsel %vm81, %v92, %v94
    %v96 = vshll.u32 %v56, 8
    %v97 = vmul.u32.u64.compose %v96, %v95
    %v98 = vextract.low.u32 %v97
    %v99 = vextract.high.u32 %v97
    %v100 = vmul.u32.u64.compose %v96, %v91
    %v101 = vextract.low.u32 %v100
    %v102 = vextract.high.u32 %v100
    %v103 = vmul.u32 %v96, %v87
    %v104 = vadd.s32 %v99, %v101
    %vm105 = vc.u32 %v99, %v101
    %v106 = vadd.s32 %v102, 1
    %v107 = vsel %vm105, %v106, %v102
    %v108 = vadd.s32 %v103, %v107
    %v109 = vadd.s32 %v108, 536870912
    %v110 = vshrl.u32 %v109, 30
    %v111 = vshll.u32 %v110, 30
    %v112 = vsub.s32 %v108, %v111
    %vm113 = vcmp.lt.s32.totalorder %v112, 0
    %v114 = vsub.s32 0, %v112
    %v115 = vsel %vm113, %v114, %v112
    %v116 = vclz %v115
    %v117 = vsub.s32 %v116, 2
    %vm118 = vcmp.gt.s32.totalorder 0, %v117
    %v119 = vsel %vm118, 0, %v117
    %v120 = vsub.s32 32, %v119
    %v121 = vshll.u32 %v112, %v119
    %v122 = vshrl.u32 %v104, %v120
    %v123 = vor.u32 %v121, %v122
    %v124 = vsub.s32 4294967266, %v119
    %v125 = vadd.s32 %v124, 127
    %v126 = vshll.u32 %v125, 23
    %v127 = vor.u32 4788187, %v126
    %v128 = vand.u32 2147483647, %v127
    %v130 = vcvt.s32.f32 %v123
    %v131 = vmul.f32 %v130, %v128
    %v132 = vxor.u32 %v131, 2147483648
    %v133 = vsel %vm50, %v132, %v131
    %v134 = vsub.s32 4, %v110
    %v135 = vsel %vm50, %v134, %v110
    %v136 = vsel %vm49, %v47, %v133
    %v137 = vsel %vm49, 0, %v135
    %v138 = vcosq.f32.pop %v136
    %v139 = vsinq.f32.pop %v136
    %vm140 = vweird.f32 %v47
    %v141 = vand.u32 %v137, 3
    %vm142 = vcmp.lt.s32.totalorder %v141, 2
    %vm143 = vcmp.eq.s32.totalorder %v141, 0
    %v144 = vxor.u32 %v139, 2147483648
    %v145 = vsel %vm143, %v138, %v144
    %vm146 = vcmp.eq.s32.totalorder %v141, 2
    %v147 = vxor.u32 %v138, 2147483648
    %v148 = vsel %vm146, %v147, %v139
    %v149 = vsel %vm142, %v145, %v148
    %v150 = vsel %vm140, nan, %v149
    %v151 = vand.u32 2147483647, %v47
    %vm152 = vcmp.le.f32.partialorder %v151, 0.7853982
    %vm153 = vcmp.lt.s32.totalorder %v47, 0
    %v154 = vand.u32 %v47, 2139095040
    %v155 = vshrl.u32 %v154, 23
    %v156 = vsub.s32 %v155, 127
    %v157 = vand.u32 2147483647, %v47
    %v158 = vand.u32 %v157, 8388607
    %v159 = vor.u32 %v158, 8388608
    %v160 = vsub.s32 0, %v159
    %v161 = vadd.s32 %v156, 1
    %vm162 = vcmp.gt.s32.totalorder %v161, 0
    %v163 = vsel %vm162, %v161, 0
    %v164 = vshrl.u32 %v163, 5
    %v165 = vand.u32 %v163, 31
    %v166 = vsub.s32 32, %v165
    %v167 = vshrl.u32 683565275, %v166
    %v168 = vshll.u32 683565275, %v165
    %v169 = vshrl.u32 2475754826, %v166
    %v170 = vor.u32 %v168, %v169
    %v171 = vshll.u32 2475754826, %v165
    %v172 = vshrl.u32 2131351028, %v166
    %v173 = vor.u32 %v171, %v172
    %v174 = vshll.u32 2131351028, %v165
    %v175 = vshrl.u32 2102212464, %v166
    %v176 = vor.u32 %v174, %v175
    %v177 = vshll.u32 2102212464, %v165
    %v178 = vshrl.u32 920167782, %v166
    %v179 = vor.u32 %v177, %v178
    %v180 = vshll.u32 920167782, %v165
    %v181 = vshrl.u32 1326507024, %v166
    %v182 = vor.u32 %v180, %v181
    %vm183 = vcmp.lt.s32.totalorder %v164, 1
    %vm184 = vcmp.lt.s32.totalorder %v164, 2
    %vm185 = vcmp.lt.s32.totalorder %v164, 3
    %vm186 = vcmp.lt.s32.totalorder %v164, 4
    %v187 = vsel %vm183, %v167, %v170
    %v188 = vsel %vm186, %v176, 2102212464
    %v189 = vsel %vm185, %v173, %v188
    %v190 = vsel %vm184, %v187, %v189
    %v191 = vsel %vm183, %v170, %v173
    %v192 = vsel %vm186, %v179, 920167782
    %v193 = vsel %vm185, %v176, %v192
    %v194 = vsel %vm184, %v191, %v193
    %v195 = vsel %vm183, %v173, %v176
    %v196 = vsel %vm186, %v182, 1326507024
    %v197 = vsel %vm185, %v179, %v196
    %v198 = vsel %vm184, %v195, %v197
    %v199 = vshll.u32 %v159, 8
    %v200 = vmul.u32.u64.compose %v199, %v198
    %v201 = vextract.low.u32 %v200
    %v202 = vextract.high.u32 %v200
    %v203 = vmul.u32.u64.compose %v199, %v194
    %v204 = vextract.low.u32 %v203
    %v205 = vextract.high.u32 %v203
    %v206 = vmul.u32 %v199, %v190
    %v207 = vadd.s32 %v202, %v204
    %vm208 = vc.u32 %v202, %v204
    %v209 = vadd.s32 %v205, 1
    %v210 = vsel %vm208, %v209, %v205
    %v211 = vadd.s32 %v206, %v210
    %v212 = vadd.s32 %v211, 536870912
    %v213 = vshrl.u32 %v212, 30
    %v214 = vshll.u32 %v213, 30
    %v215 = vsub.s32 %v211, %v214
    %vm216 = vcmp.lt.s32.totalorder %v215, 0
    %v217 = vsub.s32 0, %v215
    %v218 = vsel %vm216, %v217, %v215
    %v219 = vclz %v218
    %v220 = vsub.s32 %v219, 2
    %vm221 = vcmp.gt.s32.totalorder 0, %v220
    %v222 = vsel %vm221, 0, %v220
    %v223 = vsub.s32 32, %v222
    %v224 = vshll.u32 %v215, %v222
    %v225 = vshrl.u32 %v207, %v223
    %v226 = vor.u32 %v224, %v225
    %v227 = vsub.s32 4294967266, %v222
    %v228 = vadd.s32 %v227, 127
    %v229 = vshll.u32 %v228, 23
    %v230 = vor.u32 4788187, %v229
    %v231 = vand.u32 2147483647, %v230
    %v233 = vcvt.s32.f32 %v226
    %v234 = vmul.f32 %v233, %v231
    %v235 = vxor.u32 %v234, 2147483648
    %v236 = vsel %vm153, %v235, %v234
    %v237 = vsub.s32 4, %v213
    %v238 = vsel %vm153, %v237, %v213
    %v239 = vsel %vm152, %v47, %v236
    %v240 = vsel %vm152, 0, %v238
    %v241 = vcosq.f32.pop %v239
    %v242 = vsinq.f32.pop %v239
    %vm243 = vweird.f32 %v47
    %v244 = vadd.s32 %v240, 3
    %v245 = vand.u32 %v244, 3
    %vm246 = vcmp.lt.s32.totalorder %v245, 2
    %vm247 = vcmp.eq.s32.totalorder %v245, 0
    %v248 = vxor.u32 %v242, 2147483648
    %v249 = vsel %vm247, %v241, %v248
    %vm250 = vcmp.eq.s32.totalorder %v245, 2
    %v251 = vxor.u32 %v241, 2147483648
    %v252 = vsel %vm250, %v251, %v242
    %v253 = vsel %vm246, %v249, %v252
    %v254 = vsel %vm243, nan, %v253
    %v255 = vsel %vm42, 1, 0
    %v256 = vlaneseq
    %v257 = vshrl.u32 %v256, 7
    %v258 = vsub.s32 1, %v257
    %v259 = vrot.slane %v255, %v258
    %vm260 = vcmp.eq.s32.totalorder %v259, 1
    %v261 = vsel %vm260, %v150, %v254
    %v262 = vld [vmem:[#allocation4] sm:$0xff]
    %v263 = vmul.f32 %v262, 5.656854
    %v264 = vadd.f32 %v263, %v261
    %vm265 = vcmask 523264
    %266 = vst.msk [vmem:[#allocation7] sm:$0xff] %vm265, %v264
    // Predicated region
    $region14: #{tpu_custom_call.1} parent=1 // pred_check
      _
    $region15: #{tpu_custom_call.1} parent=1 // pred_check_branch
      %268 = sbr.rel (0) target = $region17
    $region16: #{tpu_custom_call.1} parent=1 // pred_region
      %s270 = ssub.s32 128, 128
      %271 = vsyncadd [#allocation6], %s270
      %s273 = sshll.u32 [#allocation7], 4
      %s274 = int_to_ptr.vmem [resolvable:$true] %s273
      %276 = dma.vmem_to_hbm [thread:$0]  %s274, 128, %s3, [#allocation6]
    $region17: #{tpu_custom_call.1} parent=1 // pred_fallthru
      _
    // Predicated region
    $region18: #{tpu_custom_call.1} parent=1 // pred_check
      _
    $region19: #{tpu_custom_call.1} parent=1 // pred_check_branch
      %278 = sbr.rel (0) target = $region21
    $region20: #{tpu_custom_call.1} parent=1 // pred_region
      %279 = dma.done [#allocation6], 128
    $region21: #{tpu_custom_call.1} parent=1 // pred_fallthru
      _
    %280 = vsyncpa [#allocation5], 1
    %281 = vsyncpa [#allocation6], 1

</llo_original>
